<compile_context>
chip_gen: v6e
topology: v6e:2x2x1
jax: 0.10.0
libtpu: 0.0.40
codegen_flags: <defaults>
</compile_context>

<pallas_src>
import math

import jax
import jax.numpy as jnp
from jax.experimental import pallas as pl
from jax.experimental.pallas import tpu as pltpu


# ----------------------------------------------------------------------------
# helpers
# ----------------------------------------------------------------------------
def _round_up(x, m):
    return ((x + m - 1) // m) * m


def _choose_tiling(n, tile_max, align):
    """Pick (tile, padded) with tile % align == 0, padded % tile == 0 and
    minimal over-padding (avoids the B=300 -> padded=512 blow-up)."""
    npad = _round_up(n, align)
    if npad <= tile_max:
        return npad, npad
    nblk = -(-npad // tile_max)
    tile = _round_up(-(-npad // nblk), align)
    return tile, tile * nblk


def _pick_divisor_tile(dim, tile_max, align):
    """Largest tile <= tile_max that divides `dim` and is a multiple of
    `align` (dim is already a multiple of align)."""
    best = align
    t = align
    lim = min(dim, tile_max)
    while t <= lim:
        if dim % t == 0:
            best = t
        t += align
    return best


def prepare_irnn_params(w_x, u_h, b):
    """Pad + cast the parameters ONCE per model (not per call)."""
    k_in, H = w_x.shape
    kin_p = _round_up(k_in, 128)
    hid_p = _round_up(H, 128)
    wx_p = jnp.pad(w_x.astype(jnp.bfloat16),
                   ((0, kin_p - k_in), (0, hid_p - H)))
    uh_p = jnp.pad(u_h.astype(jnp.bfloat16),
                   ((0, hid_p - H), (0, hid_p - H)))
    b_p = jnp.pad(b.astype(jnp.float32)[None, :], ((0, 0), (0, hid_p - H)))
    return dict(wx=wx_p, uh=uh_p, b=b_p, k_in=k_in, H=H)


# ----------------------------------------------------------------------------
# Kernels
# ----------------------------------------------------------------------------
def _xw_bias_kernel(x_ref, w_ref, b_ref, o_ref):
    """One (tm, kin_p) x (kin_p, tn) MXU tile: X @ W_x + b (no K grid axis)."""
    acc = jnp.dot(x_ref[...], w_ref[...], preferred_element_type=jnp.float32)
    o_ref[...] = (acc + b_ref[...]).astype(o_ref.dtype)


def _irnn_cell_kernel(x_ref, h_ref, wx_ref, uh_ref, b_ref, o_ref):
    """Single IRNN step tile: relu(x @ W_x + h @ U_h + b), two dots, f32 acc."""
    acc = jnp.dot(x_ref[...], wx_ref[...], preferred_element_type=jnp.float32)
    acc = acc + jnp.dot(h_ref[...], uh_ref[...],
                        preferred_element_type=jnp.float32)
    o_ref[...] = jnp.maximum(acc + b_ref[...], 0.0).astype(o_ref.dtype)


def _make_rec_kernel(t_chunk):
    """Recurrent kernel over one time-chunk: h_t = relu(XW_t + h_{t-1}@U_h).

    h is carried in f32 in a VMEM scratch across the whole (arbitrary) time
    axis of the grid; only the dot operand is cast to bf16.
    """
    def rec_kernel(xw_ref, uh_ref, o_ref, h_scr):
        @pl.when(pl.program_id(1) == 0)
        def _():
            h_scr[...] = jnp.zeros_like(h_scr)        # h_0 = 0 (module.reset())

        uh = uh_ref[...]                              # resident bf16 weights

        def step(s, carry):
            pre = xw_ref[s].astype(jnp.float32) + jnp.dot(
                h_scr[...].astype(jnp.bfloat16), uh,
                preferred_element_type=jnp.float32)
            h_new = jnp.maximum(pre, 0.0)
            h_scr[...] = h_new                        # f32 carry (no requant)
            o_ref[s] = h_new.astype(o_ref.dtype)      # bf16 writeback
            return carry

        jax.lax.fori_loop(0, t_chunk, step, 0, unroll=True)

    return rec_kernel


# ----------------------------------------------------------------------------
# Phase 1: big time-independent input projection  XW = X @ W_x + b
# ----------------------------------------------------------------------------
def _input_projection(x2d, wx_p, b_p, *, tm_max=256, tn_max=512):
    M, kin_p = x2d.shape
    hid_p = wx_p.shape[1]
    tm, mp = _choose_tiling(M, tm_max, 16)
    tn = _pick_divisor_tile(hid_p, tn_max, 128)
    if mp != M:
        x2d = jnp.pad(x2d, ((0, mp - M), (0, 0)))

    cost = pl.CostEstimate(
        flops=2 * mp * kin_p * hid_p,
        transcendentals=0,
        bytes_accessed=(mp * kin_p + kin_p * hid_p) * 2 + hid_p * 4
                       + mp * hid_p * 2,
    )
    return pl.pallas_call(
        _xw_bias_kernel,
        out_shape=jax.ShapeDtypeStruct((mp, hid_p), jnp.bfloat16),
        grid_spec=pltpu.PrefetchScalarGridSpec(
            num_scalar_prefetch=0,
            grid=(mp // tm, hid_p // tn),
            in_specs=[
                pl.BlockSpec((tm, kin_p), lambda i, j: (i, 0)),
                pl.BlockSpec((kin_p, tn), lambda i, j: (0, j)),
                pl.BlockSpec((1, tn), lambda i, j: (0, j)),
            ],
            out_specs=pl.BlockSpec((tm, tn), lambda i, j: (i, j)),
        ),
        compiler_params=pltpu.CompilerParams(
            dimension_semantics=("parallel", "parallel")),
        cost_estimate=cost,
    )(x2d, wx_p, b_p)


# ----------------------------------------------------------------------------
# Single IRNNCell step (cell forward)
# ----------------------------------------------------------------------------
def irnn_cell_forward(x_t, h_prev, params, *, tm_max=256, tn_max=512):
    """relu(x_t @ W_x + h_prev @ U_h + b) with pre-padded params."""
    B, k_in = x_t.shape
    H = params["H"]
    wx_p, uh_p, b_p = params["wx"], params["uh"], params["b"]
    kin_p, hid_p = wx_p.shape

    tm, bp = _choose_tiling(B, tm_max, 16)          # bf16 vreg is [16,128]
    tn = _pick_divisor_tile(hid_p, tn_max, 128)
    # v7x: give the second TensorCore work when the grid would otherwise be 1x1.
    if (bp // tm) * (hid_p // tn) == 1 and hid_p % 256 == 0:
        tn = hid_p // 2

    x = jnp.pad(x_t.astype(jnp.bfloat16), ((0, bp - B), (0, kin_p - k_in)))
    h = jnp.pad(h_prev.astype(jnp.bfloat16), ((0, bp - B), (0, hid_p - H)))

    cost = pl.CostEstimate(
        flops=2 * bp * (kin_p + hid_p) * hid_p,
        transcendentals=0,
        bytes_accessed=(bp * (kin_p + hid_p) + (kin_p + hid_p) * hid_p) * 2
                       + hid_p * 4 + bp * hid_p * 2,
    )
    out = pl.pallas_call(
        _irnn_cell_kernel,
        out_shape=jax.ShapeDtypeStruct((bp, hid_p), jnp.bfloat16),
        grid_spec=pltpu.PrefetchScalarGridSpec(
            num_scalar_prefetch=0,
            grid=(bp // tm, hid_p // tn),
            in_specs=[
                pl.BlockSpec((tm, kin_p), lambda i, j: (i, 0)),    # x_t
                pl.BlockSpec((tm, hid_p), lambda i, j: (i, 0)),    # h_{t-1}
                pl.BlockSpec((kin_p, tn), lambda i, j: (0, j)),    # W_x
                pl.BlockSpec((hid_p, tn), lambda i, j: (0, j)),    # U_h
                pl.BlockSpec((1, tn), lambda i, j: (0, j)),        # b
            ],
            out_specs=pl.BlockSpec((tm, tn), lambda i, j: (i, j)),
        ),
        compiler_params=pltpu.CompilerParams(
            dimension_semantics=("parallel", "parallel")),
        cost_estimate=cost,
    )(x, h, wx_p, uh_p, b_p)

    return out[:B, :H]


# ----------------------------------------------------------------------------
# Fused-sequence forward: hoisted input projection + resident-weight recurrence
# ----------------------------------------------------------------------------
def irnn_sequence_forward(x_seq, w_x, u_h, b, *, t_chunk=8, bm_max=256,
                          tn_max=512):
    """Run the IRNN cell over a full sequence with h_0 = 0.

    x_seq: (T, B, input_size) -> (T, B, hidden_size) bf16 hidden states.
    """
    T, B, k_in = x_seq.shape
    H = w_x.shape[1]
    params = prepare_irnn_params(w_x, u_h, b)
    wx_p, uh_p, b_p = params["wx"], params["uh"], params["b"]
    kin_p, hid_p = wx_p.shape

    bm, bp = _choose_tiling(B, bm_max, 16)

    # ---- phase 1: time-independent X @ W_x + b as ONE big MXU matmul -------
    x = jnp.pad(x_seq.astype(jnp.bfloat16),
                ((0, 0), (0, bp - B), (0, kin_p - k_in)))
    xw_flat = _input_projection(x.reshape(T * bp, kin_p), wx_p, b_p,
                                tn_max=tn_max)
    xw = xw_flat[:T * bp].reshape(T, bp, hid_p)

    # ---- phase 2: serial recurrence with U_h resident in VMEM --------------
    t_c = min(t_chunk, T)
    tp = _round_up(T, t_c)
    if tp != T:                       # padded steps are harmless & sliced off
        xw = jnp.pad(xw, ((0, tp - T), (0, 0), (0, 0)))

    # explicit scoped-VMEM budget: resident U_h (single-buffered) + double-
    # buffered xw/out chunks + f32 h scratch, with headroom.
    blk_io = t_c * bm * hid_p * 2
    vmem_needed = hid_p * hid_p * 2 + 4 * blk_io + bm * hid_p * 4
    vmem_limit = int(min(max(vmem_needed + (4 << 20), 16 << 20), 64 << 20))

    out = pl.pallas_call(
        _make_rec_kernel(t_c),
        out_shape=jax.ShapeDtypeStruct((tp, bp, hid_p), jnp.bfloat16),
        grid_spec=pltpu.PrefetchScalarGridSpec(
            num_scalar_prefetch=0,
            grid=(bp // bm, tp // t_c),
            in_specs=[
                pl.BlockSpec((t_c, bm, hid_p), lambda bi, tc: (tc, bi, 0)),
                # resident recurrent weights: constant index, single-buffered
                pl.BlockSpec((hid_p, hid_p), lambda bi, tc: (0, 0),
                             pipeline_mode=pl.Buffered(1)),
            ],
            out_specs=pl.BlockSpec((t_c, bm, hid_p),
                                   lambda bi, tc: (tc, bi, 0)),
            scratch_shapes=[pltpu.VMEM((bm, hid_p), jnp.float32)],
        ),
        compiler_params=pltpu.CompilerParams(
            # batch blocks are independent (megacore-shardable on v7x);
            # the time axis carries the recurrence -> arbitrary.
            dimension_semantics=("parallel", "arbitrary"),
            vmem_limit_bytes=vmem_limit),
    )(xw, uh_p)

    return out[:T, :B, :H]


# ----------------------------------------------------------------------------
# references (mirror the kernels' bf16-operand / f32-accumulate quantization)
# ----------------------------------------------------------------------------
def reference_step(x_t, w_x, h_prev, u_h, b):
    pre = (jnp.dot(x_t.astype(jnp.bfloat16), w_x.astype(jnp.bfloat16),
                   preferred_element_type=jnp.float32)
           + jnp.dot(h_prev.astype(jnp.bfloat16), u_h.astype(jnp.bfloat16),
                     preferred_element_type=jnp.float32)
           + b.astype(jnp.float32)[None, :])
    return jnp.maximum(pre, 0.0)


def reference_sequence(x_seq, w_x, u_h, b):
    T, B, k_in = x_seq.shape
    H = w_x.shape[1]
    xw = (jnp.dot(x_seq.reshape(T * B, k_in).astype(jnp.bfloat16),
                  w_x.astype(jnp.bfloat16), preferred_element_type=jnp.float32)
          + b.astype(jnp.float32)[None, :]).astype(jnp.bfloat16)
    xw = xw.reshape(T, B, H)
    uq = u_h.astype(jnp.bfloat16)
    h = jnp.zeros((B, H), jnp.float32)
    outs = []
    for t in range(T):
        pre = xw[t].astype(jnp.float32) + jnp.dot(
            h.astype(jnp.bfloat16), uq, preferred_element_type=jnp.float32)
        h = jnp.maximum(pre, 0.0)
        outs.append(h)
    return jnp.stack(outs, 0)


# ----------------------------------------------------------------------------
if __name__ == "__main__":
    batch, input_size, hidden_size, seq_len = 2, 16, 32, 8

    key = jax.random.PRNGKey(0)
    k_x, k_w, k_seq = jax.random.split(key, 3)

    # Parameter init matching the module's __init__:
    #   W_x : xavier_normal_, U_h : identity, b : zeros
    std = math.sqrt(2.0 / (input_size + hidden_size))
    w_x = jax.random.normal(k_w, (input_size, hidden_size), jnp.float32) * std
    u_h = jnp.eye(hidden_size, dtype=jnp.float32)
    b = jnp.zeros((hidden_size,), jnp.float32)

    # weight pad/cast hoisted out of the per-step call (once per model)
    params = prepare_irnn_params(w_x, u_h, b)

    # --- single step (cell) -------------------------------------------------
    x_t = jax.random.normal(k_x, (batch, input_size), jnp.float32)
    h0 = jnp.zeros((batch, hidden_size), jnp.float32)     # module.reset()

    out1 = jax.block_until_ready(irnn_cell_forward(x_t, h0, params))
    ref1 = reference_step(x_t, w_x, h0, u_h, b)
    assert out1.shape == (batch, hidden_size)
    assert jnp.allclose(out1.astype(jnp.float32), ref1, atol=2e-2, rtol=2e-2)

    # second step: feed the output back as the hidden state (recurrence path)
    out2 = jax.block_until_ready(
        irnn_cell_forward(x_t, out1.astype(jnp.float32), params))
    ref2 = reference_step(x_t, w_x, out1.astype(jnp.float32), u_h, b)
    assert jnp.allclose(out2.astype(jnp.float32), ref2, atol=2e-2, rtol=2e-2)

    # --- fused full sequence (hoisted X@W_x + resident U_h recurrence) ------
    x_seq = jax.random.normal(k_seq, (seq_len, batch, input_size), jnp.float32)
    seq_out = jax.block_until_ready(irnn_sequence_forward(x_seq, w_x, u_h, b))
    seq_ref = reference_sequence(x_seq, w_x, u_h, b)
    assert seq_out.shape == (seq_len, batch, hidden_size)
    assert jnp.allclose(seq_out.astype(jnp.float32), seq_ref,
                        atol=3e-2, rtol=3e-2)

    print("KERNEL_OK")
</pallas_src>

<mosaic_0001>
module attributes {stable_mosaic.version = 11 : i64} {
  func.func @_irnn_cell_kernel(%arg0: i32, %arg1: i32, %arg2: memref<16x128xbf16, #tpu.memory_space<vmem>>, %arg3: memref<16x128xbf16, #tpu.memory_space<vmem>>, %arg4: memref<128x128xbf16, #tpu.memory_space<vmem>>, %arg5: memref<128x128xbf16, #tpu.memory_space<vmem>>, %arg6: memref<1x128xf32, #tpu.memory_space<vmem>>, %arg7: memref<16x128xbf16, #tpu.memory_space<vmem>>) attributes {dimension_semantics = [#tpu.dimension_semantics<parallel>, #tpu.dimension_semantics<parallel>], iteration_bounds = array<i64: 1, 1>, scalar_prefetch = 0 : i64, scratch_operands = 0 : i64, tpu.core_type = #tpu.core_type<tc>, window_params = [{transform_indices = @transform_0, window_bounds = array<i64: 16, 128>}, {transform_indices = @transform_1, window_bounds = array<i64: 16, 128>}, {transform_indices = @transform_2, window_bounds = array<i64: 128, 128>}, {transform_indices = @transform_3, window_bounds = array<i64: 128, 128>}, {transform_indices = @transform_4, window_bounds = array<i64: 1, 128>}, {transform_indices = @transform_5, window_bounds = array<i64: 16, 128>}]} {
    %c0 = arith.constant 0 : index
    %c0_0 = arith.constant 0 : index
    %0 = vector.load %arg2[%c0, %c0_0] : memref<16x128xbf16, #tpu.memory_space<vmem>>, vector<16x128xbf16>
    %c0_1 = arith.constant 0 : index
    %c0_2 = arith.constant 0 : index
    %1 = vector.load %arg4[%c0_1, %c0_2] : memref<128x128xbf16, #tpu.memory_space<vmem>>, vector<128x128xbf16>
    %cst = arith.constant dense<0.000000e+00> : vector<16x128xf32>
    %2 = tpu.matmul %0, %1, %cst {dimension_numbers = #tpu.dot_dimension_numbers<[1], [0], [0], [1], [0, 0, 1, 1], [], []>} : vector<16x128xbf16>, vector<128x128xbf16>, vector<16x128xf32> -> vector<16x128xf32>
    %c0_3 = arith.constant 0 : index
    %c0_4 = arith.constant 0 : index
    %3 = vector.load %arg3[%c0_3, %c0_4] : memref<16x128xbf16, #tpu.memory_space<vmem>>, vector<16x128xbf16>
    %c0_5 = arith.constant 0 : index
    %c0_6 = arith.constant 0 : index
    %4 = vector.load %arg5[%c0_5, %c0_6] : memref<128x128xbf16, #tpu.memory_space<vmem>>, vector<128x128xbf16>
    %cst_7 = arith.constant dense<0.000000e+00> : vector<16x128xf32>
    %5 = tpu.matmul %3, %4, %cst_7 {dimension_numbers = #tpu.dot_dimension_numbers<[1], [0], [0], [1], [0, 0, 1, 1], [], []>} : vector<16x128xbf16>, vector<128x128xbf16>, vector<16x128xf32> -> vector<16x128xf32>
    %6 = arith.addf %2, %5 : vector<16x128xf32>
    %c0_8 = arith.constant 0 : index
    %c0_9 = arith.constant 0 : index
    %7 = vector.load %arg6[%c0_8, %c0_9] : memref<1x128xf32, #tpu.memory_space<vmem>>, vector<1x128xf32>
    %8 = vector.broadcast %7 : vector<1x128xf32> to vector<16x128xf32>
    %9 = arith.addf %6, %8 : vector<16x128xf32>
    %cst_10 = arith.constant 0.000000e+00 : f32
    %10 = vector.broadcast %cst_10 : f32 to vector<16x128xf32>
    %11 = arith.maximumf %9, %10 : vector<16x128xf32>
    %12 = arith.truncf %11 : vector<16x128xf32> to vector<16x128xbf16>
    %c0_11 = arith.constant 0 : index
    %c0_12 = arith.constant 0 : index
    %13 = vector.load %arg7[%c0_11, %c0_12] : memref<16x128xbf16, #tpu.memory_space<vmem>>, vector<16x128xbf16>
    tpu.vector_store %arg7[%c0_11, %c0_12], %12 {strides = array<i32>} : memref<16x128xbf16, #tpu.memory_space<vmem>>, vector<16x128xbf16>,
    return
  }
  func.func @transform_0(%arg0: i32, %arg1: i32) -> (i32, i32) {
    %c0_i32 = arith.constant 0 : i32
    %c0_i32_0 = arith.constant 0 : i32
    return %arg0, %c0_i32 : i32, i32
  }
  func.func @transform_1(%arg0: i32, %arg1: i32) -> (i32, i32) {
    %c0_i32 = arith.constant 0 : i32
    %c0_i32_0 = arith.constant 0 : i32
    return %arg0, %c0_i32 : i32, i32
  }
  func.func @transform_2(%arg0: i32, %arg1: i32) -> (i32, i32) {
    %c0_i32 = arith.constant 0 : i32
    %c0_i32_0 = arith.constant 0 : i32
    return %c0_i32, %arg1 : i32, i32
  }
  func.func @transform_3(%arg0: i32, %arg1: i32) -> (i32, i32) {
    %c0_i32 = arith.constant 0 : i32
    %c0_i32_0 = arith.constant 0 : i32
    return %c0_i32, %arg1 : i32, i32
  }
  func.func @transform_4(%arg0: i32, %arg1: i32) -> (i32, i32) {
    %c0_i32 = arith.constant 0 : i32
    %c0_i32_0 = arith.constant 0 : i32
    return %c0_i32, %arg1 : i32, i32
  }
  func.func @transform_5(%arg0: i32, %arg1: i32) -> (i32, i32) {
    %c0_i32 = arith.constant 0 : i32
    return %arg0, %arg1 : i32, i32
  }
}

</mosaic_0001>

<llo_original>
// kernel: tpu_custom_call.1
$region0: #{tpu_custom_call.1}
  #allocation0 [shape = 'u32[]', space=smem, size = 0x4, offset = 0x4, fixed_abs, tag = 'smem constant byte address 0x4 - core index']
  #allocation1 [shape = 'u32[144,128]{1,0:T(1,128)}', space=vmem, size = 0x12000, scoped, tag = 'internal scratch']
  %s0 = inlined_call_operand.hbm [shape: bf16[16,128], index: 0, kind: input, shape index: {}]
  %s1 = inlined_call_operand.hbm [shape: bf16[16,128], index: 1, kind: input, shape index: {}]
  %s2 = inlined_call_operand.hbm [shape: bf16[128,128], index: 2, kind: input, shape index: {}]
  %s3 = inlined_call_operand.hbm [shape: bf16[128,128], index: 3, kind: input, shape index: {}]
  %s4 = inlined_call_operand.vmem [shape: f32[1,128], index: 4, kind: input, shape index: {}]
  %s5 = inlined_call_operand.hbm [shape: bf16[16,128], index: 5, kind: output, shape index: {}]
  %s6 = sld [smem:[#allocation0]]
  $region46: #{tpu_custom_call.1} parent=0
    _
  %s8 = ssub.s32 1, %s6
  %s9 = scalar_select 0, %s8, %s6
  $region1: #{tpu_custom_call.1} parent=0
    #allocation2 [shape = 'u8[4096]{0}', space=vmem, size = 0x1000, scoped, tag = 'input window, operand 0, single buffered']
    #allocation3 [shape = 's32[1]{0}', space=sflag, size = 0x4, scoped, tag = 'scoped memory for tpu_custom_call.1']
    #allocation4 [shape = 's32[1]{0}', space=sflag, size = 0x4, scoped, tag = 'scoped memory for tpu_custom_call.1']
    #allocation5 [shape = 'u8[4096]{0}', space=vmem, size = 0x1000, scoped, tag = 'input window, operand 1, single buffered']
    #allocation6 [shape = 's32[1]{0}', space=sflag, size = 0x4, scoped, tag = 'scoped memory for tpu_custom_call.1']
    #allocation7 [shape = 'u8[32768]{0}', space=vmem, size = 0x8000, scoped, tag = 'input window, operand 2, single buffered']
    #allocation8 [shape = 'u8[32768]{0}', space=vmem, size = 0x8000, scoped, tag = 'input window, operand 3, single buffered']
    #allocation9 [shape = 's32[1]{0}', space=sflag, size = 0x4, scoped, tag = 'scoped memory for tpu_custom_call.1']
    #allocation10 [shape = 'u8[4096]{0}', space=vmem, size = 0x1000, scoped, tag = 'output window, operand 0, single buffered']
    %10 = vsyncpa [#allocation3], 0
    %11 = vsyncpa [#allocation6], 0
    %12 = vsyncpa [#allocation9], 0
    %13 = vsyncpa [#allocation4], 0
    // Predicated region
    $region2: #{tpu_custom_call.1} parent=1 // pred_check
      _
    $region3: #{tpu_custom_call.1} parent=1 // pred_check_branch
      %15 = sbr.rel (0) target = $region5
    $region4: #{tpu_custom_call.1} parent=1 // pred_region
      %s17 = ssub.s32 128, 128
      %18 = vsyncadd [#allocation3], %s17
      %s19 = sshll.u32 [#allocation2], 4
      %s20 = int_to_ptr.vmem [resolvable:$true] %s19
      %25 = dma.hbm_to_vmem [thread:$0]  %s0, 128, %s20, [#allocation3], 64, 64, 4
    $region5: #{tpu_custom_call.1} parent=1 // pred_fallthru
      _
    // Predicated region
    $region6: #{tpu_custom_call.1} parent=1 // pred_check
      _
    $region7: #{tpu_custom_call.1} parent=1 // pred_check_branch
      %27 = sbr.rel (0) target = $region9
    $region8: #{tpu_custom_call.1} parent=1 // pred_region
      %s29 = ssub.s32 128, 128
      %30 = vsyncadd [#allocation6], %s29
      %s31 = sshll.u32 [#allocation5], 4
      %s32 = int_to_ptr.vmem [resolvable:$true] %s31
      %37 = dma.hbm_to_vmem [thread:$0]  %s1, 128, %s32, [#allocation6], 64, 64, 4
    $region9: #{tpu_custom_call.1} parent=1 // pred_fallthru
      _
    // Predicated region
    $region10: #{tpu_custom_call.1} parent=1 // pred_check
      _
    $region11: #{tpu_custom_call.1} parent=1 // pred_check_branch
      %39 = sbr.rel (0) target = $region13
    $region12: #{tpu_custom_call.1} parent=1 // pred_region
      %s41 = ssub.s32 1024, 1024
      %42 = vsyncadd [#allocation6], %s41
      %s43 = sshll.u32 [#allocation7], 4
      %s44 = int_to_ptr.vmem [resolvable:$true] %s43
      %49 = dma.hbm_to_vmem [thread:$0]  %s2, 1024, %s44, [#allocation6], 64, 64, 4
    $region13: #{tpu_custom_call.1} parent=1 // pred_fallthru
      _
    // Predicated region
    $region14: #{tpu_custom_call.1} parent=1 // pred_check
      _
    $region15: #{tpu_custom_call.1} parent=1 // pred_check_branch
      %51 = sbr.rel (0) target = $region17
    $region16: #{tpu_custom_call.1} parent=1 // pred_region
      %s53 = ssub.s32 1024, 1024
      %54 = vsyncadd [#allocation9], %s53
      %s55 = sshll.u32 [#allocation8], 4
      %s56 = int_to_ptr.vmem [resolvable:$true] %s55
      %61 = dma.hbm_to_vmem [thread:$0]  %s3, 1024, %s56, [#allocation9], 64, 64, 4
    $region17: #{tpu_custom_call.1} parent=1 // pred_fallthru
      _
    // Predicated region
    $region18: #{tpu_custom_call.1} parent=1 // pred_check
      _
    $region19: #{tpu_custom_call.1} parent=1 // pred_check_branch
      %63 = sbr.rel (0) target = $region21
    $region20: #{tpu_custom_call.1} parent=1 // pred_region
      _
    $region21: #{tpu_custom_call.1} parent=1 // pred_fallthru
      _
    // Predicated region
    $region22: #{tpu_custom_call.1} parent=1 // pred_check
      _
    $region23: #{tpu_custom_call.1} parent=1 // pred_check_branch
      %65 = sbr.rel (0) target = $region25
    $region24: #{tpu_custom_call.1} parent=1 // pred_region
      %66 = dma.done [#allocation3], 128
    $region25: #{tpu_custom_call.1} parent=1 // pred_fallthru
      _
    // Predicated region
    $region26: #{tpu_custom_call.1} parent=1 // pred_check
      _
    $region27: #{tpu_custom_call.1} parent=1 // pred_check_branch
      %68 = sbr.rel (0) target = $region29
    $region28: #{tpu_custom_call.1} parent=1 // pred_region
      %69 = dma.done [#allocation6], 128
    $region29: #{tpu_custom_call.1} parent=1 // pred_fallthru
      _
    // Predicated region
    $region30: #{tpu_custom_call.1} parent=1 // pred_check
      _
    $region31: #{tpu_custom_call.1} parent=1 // pred_check_branch
      %71 = sbr.rel (0) target = $region33
    $region32: #{tpu_custom_call.1} parent=1 // pred_region
      %72 = dma.done [#allocation6], 1024
    $region33: #{tpu_custom_call.1} parent=1 // pred_fallthru
      _
    // Predicated region
    $region34: #{tpu_custom_call.1} parent=1 // pred_check
      _
    $region35: #{tpu_custom_call.1} parent=1 // pred_check_branch
      %74 = sbr.rel (0) target = $region37
    $region36: #{tpu_custom_call.1} parent=1 // pred_region
      %75 = dma.done [#allocation9], 1024
    $region37: #{tpu_custom_call.1} parent=1 // pred_fallthru
      _
    %v77 = vld [vmem:[#allocation2] sm:$0xf]
    %v78 = vld [vmem:[#allocation2 + $0x4] sm:$0xf]
    %v79 = vld [vmem:[#allocation7] sm:$0xf]
    %v80 = vld [vmem:[#allocation7 + $0x4] sm:$0xf]
    %v81 = vld [vmem:[#allocation7 + $0x8] sm:$0xf]
    %v82 = vld [vmem:[#allocation7 + $0xc] sm:$0xf]
    %v83 = vld [vmem:[#allocation7 + $0x10] sm:$0xf]
    %v84 = vld [vmem:[#allocation7 + $0x14] sm:$0xf]
    %v85 = vld [vmem:[#allocation7 + $0x18] sm:$0xf]
    %v86 = vld [vmem:[#allocation7 + $0x1c] sm:$0xf]
    %v87 = vld [vmem:[#allocation7 + $0x20] sm:$0xf]
    %v88 = vld [vmem:[#allocation7 + $0x24] sm:$0xf]
    %v89 = vld [vmem:[#allocation7 + $0x28] sm:$0xf]
    %v90 = vld [vmem:[#allocation7 + $0x2c] sm:$0xf]
    %v91 = vld [vmem:[#allocation7 + $0x30] sm:$0xf]
    %v92 = vld [vmem:[#allocation7 + $0x34] sm:$0xf]
    %v93 = vld [vmem:[#allocation7 + $0x38] sm:$0xf]
    %v94 = vld [vmem:[#allocation7 + $0x3c] sm:$0xf]
    %v95 = vld [vmem:[#allocation5] sm:$0xf]
    %v96 = vld [vmem:[#allocation5 + $0x4] sm:$0xf]
    %v97 = vld [vmem:[#allocation8] sm:$0xf]
    %v98 = vld [vmem:[#allocation8 + $0x4] sm:$0xf]
    %v99 = vld [vmem:[#allocation8 + $0x8] sm:$0xf]
    %v100 = vld [vmem:[#allocation8 + $0xc] sm:$0xf]
    %v101 = vld [vmem:[#allocation8 + $0x10] sm:$0xf]
    %v102 = vld [vmem:[#allocation8 + $0x14] sm:$0xf]
    %v103 = vld [vmem:[#allocation8 + $0x18] sm:$0xf]
    %v104 = vld [vmem:[#allocation8 + $0x1c] sm:$0xf]
    %v105 = vld [vmem:[#allocation8 + $0x20] sm:$0xf]
    %v106 = vld [vmem:[#allocation8 + $0x24] sm:$0xf]
    %v107 = vld [vmem:[#allocation8 + $0x28] sm:$0xf]
    %v108 = vld [vmem:[#allocation8 + $0x2c] sm:$0xf]
    %v109 = vld [vmem:[#allocation8 + $0x30] sm:$0xf]
    %v110 = vld [vmem:[#allocation8 + $0x34] sm:$0xf]
    %v111 = vld [vmem:[#allocation8 + $0x38] sm:$0xf]
    %v112 = vld [vmem:[#allocation8 + $0x3c] sm:$0xf]
    %v115 = vunpack.c.l.b16 %v95
    %v116 = vunpack.c.l.b16 %v96
    %v117 = vpack.c.b16 %v116, %v115
    %v135 = vunpack.c.l.b16 %v97
    %v136 = vunpack.c.l.b16 %v98
    %v137 = vunpack.c.l.b16 %v99
    %v138 = vunpack.c.l.b16 %v100
    %v139 = vunpack.c.l.b16 %v101
    %v140 = vunpack.c.l.b16 %v102
    %v141 = vunpack.c.l.b16 %v103
    %v142 = vunpack.c.l.b16 %v104
    %v143 = vunpack.c.l.b16 %v105
    %v144 = vunpack.c.l.b16 %v106
    %v145 = vunpack.c.l.b16 %v107
    %v146 = vunpack.c.l.b16 %v108
    %v147 = vunpack.c.l.b16 %v109
    %v148 = vunpack.c.l.b16 %v110
    %v149 = vunpack.c.l.b16 %v111
    %v150 = vunpack.c.l.b16 %v112
    %v151 = vpack.c.b16 %v136, %v135
    %v152 = vpack.c.b16 %v138, %v137
    %v153 = vpack.c.b16 %v140, %v139
    %v154 = vpack.c.b16 %v142, %v141
    %v155 = vpack.c.b16 %v144, %v143
    %v156 = vpack.c.b16 %v146, %v145
    %v157 = vpack.c.b16 %v148, %v147
    %v158 = vpack.c.b16 %v150, %v149
    %167 = vmatprep.subr.bf16.mxu0 0
    %168 = vmatpush1.bf16.msra.mxu0 %v158
    %169 = vmatprep.subr.bf16.mxu0 0
    %170 = vmatpush1.bf16.msra.mxu0 %v157
    %171 = vmatprep.subr.bf16.mxu0 0
    %172 = vmatpush1.bf16.msra.mxu0 %v156
    %173 = vmatprep.subr.bf16.mxu0 0
    %174 = vmatpush1.bf16.msra.mxu0 %v155
    %175 = vmatprep.subr.bf16.mxu0 0
    %176 = vmatpush1.bf16.msra.mxu0 %v154
    %177 = vmatprep.subr.bf16.mxu0 0
    %178 = vmatpush1.bf16.msra.mxu0 %v153
    %179 = vmatprep.subr.bf16.mxu0 0
    %180 = vmatpush1.bf16.msra.mxu0 %v152
    %181 = vmatprep.subr.bf16.mxu0 0
    %182 = vmatpush1.bf16.msra.mxu0 %v151
    %183 = vmatprep.subr.bf16.mxu0 0
    %184 = vmatpush2.bf16.msra.mxu0 0
    %185 = vmatprep.subr.bf16.mxu0 0
    %186 = vmatpush2.bf16.msra.mxu0 0
    %187 = vmatprep.subr.bf16.mxu0 0
    %188 = vmatpush2.bf16.msra.mxu0 0
    %189 = vmatprep.subr.bf16.mxu0 0
    %190 = vmatpush2.bf16.msra.mxu0 0
    %191 = vmatprep.subr.bf16.mxu0 0
    %192 = vmatpush2.bf16.msra.mxu0 0
    %193 = vmatprep.subr.bf16.mxu0 0
    %194 = vmatpush2.bf16.msra.mxu0 0
    %195 = vmatprep.subr.bf16.mxu0 0
    %196 = vmatpush2.bf16.msra.mxu0 0
    %197 = vmatprep.subr.bf16.mxu0 0
    %198 = vmatpush2.bf16.msra.mxu0 0
    %199 = vmatprep.mubr.bf16.mxu0 0
    %200 = vmatmul.mubr.bf16.gmra.mxu0 %v117
    %v201 = vpop.f32.mrf.mxu0
    %v202 = vadd.f32 0.0, %v201
    %v203 = vpop.f32.mrf.mxu0
    %v204 = vpop.f32.mrf.mxu0
    %v205 = vadd.f32 0.0, %v204
    %v206 = vpop.f32.mrf.mxu0
    %207 = vdwg.mxu0
    %v210 = vunpack.c.l.b16 %v77
    %v211 = vunpack.c.l.b16 %v78
    %v212 = vpack.c.b16 %v211, %v210
    %v230 = vunpack.c.l.b16 %v79
    %v231 = vunpack.c.l.b16 %v80
    %v232 = vunpack.c.l.b16 %v81
    %v233 = vunpack.c.l.b16 %v82
    %v234 = vunpack.c.l.b16 %v83
    %v235 = vunpack.c.l.b16 %v84
    %v236 = vunpack.c.l.b16 %v85
    %v237 = vunpack.c.l.b16 %v86
    %v238 = vunpack.c.l.b16 %v87
    %v239 = vunpack.c.l.b16 %v88
    %v240 = vunpack.c.l.b16 %v89
    %v241 = vunpack.c.l.b16 %v90
    %v242 = vunpack.c.l.b16 %v91
    %v243 = vunpack.c.l.b16 %v92
    %v244 = vunpack.c.l.b16 %v93
    %v245 = vunpack.c.l.b16 %v94
    %v246 = vpack.c.b16 %v231, %v230
    %v247 = vpack.c.b16 %v233, %v232
    %v248 = vpack.c.b16 %v235, %v234
    %v249 = vpack.c.b16 %v237, %v236
    %v250 = vpack.c.b16 %v239, %v238
    %v251 = vpack.c.b16 %v241, %v240
    %v252 = vpack.c.b16 %v243, %v242
    %v253 = vpack.c.b16 %v245, %v244
    %262 = vmatprep.subr.bf16.mxu0 0
    %263 = vmatpush1.bf16.msra.mxu0 %v253
    %264 = vmatprep.subr.bf16.mxu0 0
    %265 = vmatpush1.bf16.msra.mxu0 %v252
    %266 = vmatprep.subr.bf16.mxu0 0
    %267 = vmatpush1.bf16.msra.mxu0 %v251
    %268 = vmatprep.subr.bf16.mxu0 0
    %269 = vmatpush1.bf16.msra.mxu0 %v250
    %270 = vmatprep.subr.bf16.mxu0 0
    %271 = vmatpush1.bf16.msra.mxu0 %v249
    %272 = vmatprep.subr.bf16.mxu0 0
    %273 = vmatpush1.bf16.msra.mxu0 %v248
    %274 = vmatprep.subr.bf16.mxu0 0
    %275 = vmatpush1.bf16.msra.mxu0 %v247
    %276 = vmatprep.subr.bf16.mxu0 0
    %277 = vmatpush1.bf16.msra.mxu0 %v246
    %278 = vmatprep.subr.bf16.mxu0 0
    %279 = vmatpush2.bf16.msra.mxu0 0
    %280 = vmatprep.subr.bf16.mxu0 0
    %281 = vmatpush2.bf16.msra.mxu0 0
    %282 = vmatprep.subr.bf16.mxu0 0
    %283 = vmatpush2.bf16.msra.mxu0 0
    %284 = vmatprep.subr.bf16.mxu0 0
    %285 = vmatpush2.bf16.msra.mxu0 0
    %286 = vmatprep.subr.bf16.mxu0 0
    %287 = vmatpush2.bf16.msra.mxu0 0
    %288 = vmatprep.subr.bf16.mxu0 0
    %289 = vmatpush2.bf16.msra.mxu0 0
    %290 = vmatprep.subr.bf16.mxu0 0
    %291 = vmatpush2.bf16.msra.mxu0 0
    %292 = vmatprep.subr.bf16.mxu0 0
    %293 = vmatpush2.bf16.msra.mxu0 0
    %294 = vmatprep.mubr.bf16.mxu0 0
    %295 = vmatmul.mubr.bf16.gmra.mxu0 %v212
    %v296 = vpop.f32.mrf.mxu0
    %v297 = vadd.f32 %v202, %v296
    %v298 = vpop.f32.mrf.mxu0
    %v299 = vpop.f32.mrf.mxu0
    %v300 = vadd.f32 %v205, %v299
    %v301 = vpop.f32.mrf.mxu0
    %302 = vdwg.mxu0
    %v303 = vld [vmem:[%s4] sm:$0x1]
    %v305 = vlaneseq
    %v306 = vshrl.u32 %v305, 7
    %v307 = vsub.s32 0, %v306
    %v308 = vrot.slane %v303, %v307
    %v310 = vadd.f32 %v297, %v308
    %v311 = vadd.f32 %v300, %v308
    %v312 = vmax.f32 %v310, 0.0
    %v313 = vmax.f32 %v311, 0.0
    %v314 = vpack.c.bf16 %v313, %v312
    %v316 = vunpack.c.l.b16 %v314
    %v317 = vunpack.c.h.b16 %v314
    %v318 = vpack.c.b16 %v316, %v316
    %v319 = vpack.c.b16 %v317, %v317
    %322 = vst [vmem:[#allocation10] sm:$0xf] %v318
    %323 = vst [vmem:[#allocation10 + $0x4] sm:$0xf] %v319
    // Predicated region
    $region38: #{tpu_custom_call.1} parent=1 // pred_check
      _
    $region39: #{tpu_custom_call.1} parent=1 // pred_check_branch
      %325 = sbr.rel (0) target = $region41
    $region40: #{tpu_custom_call.1} parent=1 // pred_region
      %s327 = ssub.s32 128, 128
      %328 = vsyncadd [#allocation4], %s327
      %s329 = sshll.u32 [#allocation10], 4
      %s330 = int_to_ptr.vmem [resolvable:$true] %s329
      %335 = dma.vmem_to_hbm [thread:$0]  %s330, 128, %s5, [#allocation4], 64, 64, 4
    $region41: #{tpu_custom_call.1} parent=1 // pred_fallthru
      _
    // Predicated region
    $region42: #{tpu_custom_call.1} parent=1 // pred_check
      _
    $region43: #{tpu_custom_call.1} parent=1 // pred_check_branch
      %337 = sbr.rel (0) target = $region45
    $region44: #{tpu_custom_call.1} parent=1 // pred_region
      %338 = dma.done [#allocation4], 128
    $region45: #{tpu_custom_call.1} parent=1 // pred_fallthru
      _
    %339 = vsyncpa [#allocation3], 1
    %340 = vsyncpa [#allocation6], 1
    %341 = vsyncpa [#allocation9], 1
    %342 = vsyncpa [#allocation4], 1

</llo_original>
